<compile_context>
chip_gen: v6e
topology: v6e:2x2x1
jax: 0.10.0
libtpu: 0.0.40
codegen_flags: <defaults>
</compile_context>

<pallas_src>
import math

import jax
import jax.numpy as jnp
from jax import lax
from jax.experimental import pallas as pl
from jax.experimental.pallas import tpu as pltpu

KERNEL_SIZE = 4
PAD_LEFT, PAD_RIGHT = 2, 1
LANE = 128


def _conv1d_kernel(w_ref, b_ref, x_ref, o_ref):
    # w_ref: (4,) f32 in SMEM, b_ref: (1,) f32 in SMEM
    # x_ref: (TB, Lp) in VMEM (Lp % 128 == 0), o_ref: (TB, Lp) in VMEM
    x = x_ref[...].astype(jnp.float32)
    Lp = x.shape[-1]
    col = lax.broadcasted_iota(jnp.int32, x.shape, 1)

    w0 = w_ref[0]
    w1 = w_ref[1]
    w2 = w_ref[2]
    w3 = w_ref[3]
    b = b_ref[0]

    # Center tap + bias (fused init, no separate full-tile broadcast of bias).
    acc = w2 * x + b

    # x[t-1]: rotate right by 1, zero the wrapped column 0 (left zero-pad).
    xm1 = pltpu.roll(x, shift=1, axis=1)
    acc = acc + w1 * jnp.where(col >= 1, xm1, 0.0)

    # x[t-2]: rotate right by 2, zero columns 0,1 (left zero-pad of 2).
    xm2 = pltpu.roll(x, shift=2, axis=1)
    acc = acc + w0 * jnp.where(col >= 2, xm2, 0.0)

    # x[t+1]: rotate left by 1 (== right by Lp-1), zero the wrapped last column
    # (right zero-pad of 1).
    xp1 = pltpu.roll(x, shift=Lp - 1, axis=1)
    acc = acc + w3 * jnp.where(col <= Lp - 2, xp1, 0.0)

    o_ref[...] = acc.astype(o_ref.dtype)


def _pick_batch_tile(B, Lp, itemsize, target_bytes=2 * 1024 * 1024):
    """~2 MiB input block per grid step; rows a multiple of 8 (or full B)."""
    rows = max(8, target_bytes // max(1, Lp * itemsize))
    rows = max(8, (rows // 8) * 8)
    return B if B <= rows else int(rows)


def custom_conv1d(x, weight, bias, *, batch_tile=None):
    """x: (B, L) float; weight: (..., 4) float; bias: scalar float."""
    B, L = x.shape
    out_dtype = x.dtype

    # Lane-dense layout: right-pad L to a multiple of 128 only when needed.
    # (The zero right-pad also subsumes the conv's single trailing zero.)
    Lp = ((L + LANE - 1) // LANE) * LANE
    if Lp != L:
        x = jnp.pad(x, ((0, 0), (0, Lp - L)))

    w = weight.reshape(KERNEL_SIZE).astype(jnp.float32)
    b = jnp.reshape(bias, (1,)).astype(jnp.float32)

    itemsize = jnp.dtype(x.dtype).itemsize
    TB = _pick_batch_tile(B, Lp, itemsize) if batch_tile is None else min(batch_tile, B)
    grid = (pl.cdiv(B, TB),)

    out = pl.pallas_call(
        _conv1d_kernel,
        out_shape=jax.ShapeDtypeStruct((B, Lp), out_dtype),
        grid=grid,
        in_specs=[
            pl.BlockSpec(memory_space=pltpu.MemorySpace.SMEM),  # weight taps
            pl.BlockSpec(memory_space=pltpu.MemorySpace.SMEM),  # bias
            pl.BlockSpec((TB, Lp), lambda i: (i, 0)),           # x tile
        ],
        out_specs=pl.BlockSpec((TB, Lp), lambda i: (i, 0)),
        compiler_params=pltpu.CompilerParams(
            dimension_semantics=("parallel",),
            vmem_limit_bytes=32 * 1024 * 1024,
        ),
    )(w, b, x)

    if Lp != L:
        out = out[:, :L]
    return out


def _reference(x, weight, bias):
    # Pure-JAX reference of the PyTorch forward for verification.
    xpad = jnp.pad(x, ((0, 0), (PAD_LEFT, PAD_RIGHT)))
    L = x.shape[1]
    w = weight.reshape(KERNEL_SIZE)
    out = jnp.zeros_like(x) + bias
    for k in range(KERNEL_SIZE):
        out = out + w[k] * xpad[:, k:k + L]
    return out


if __name__ == "__main__":
    key = jax.random.PRNGKey(0)
    k_x, k_w, k_b, k_x2, k_x3 = jax.random.split(key, 5)

    # Deterministic Conv1d init (PyTorch default: U(-sqrt(k), sqrt(k)),
    # k = 1 / (in_channels * kernel_size) = 1/4).
    bound = 1.0 / math.sqrt(1 * KERNEL_SIZE)
    weight = jax.random.uniform(k_w, (KERNEL_SIZE,), jnp.float32, -bound, bound)
    bias = jax.random.uniform(k_b, (), jnp.float32, -bound, bound)

    # 1) Original small shape from the module spec.
    B, L = 2, 16
    x = jax.random.normal(k_x, (B, L), dtype=jnp.float32)
    out = jax.block_until_ready(custom_conv1d(x, weight, bias))
    ref = _reference(x, weight, bias)
    assert out.shape == (B, L)
    assert jnp.allclose(out, ref, atol=1e-5, rtol=1e-5)

    # 2) L not a multiple of 128 -> exercises the lane-pad + slice path and the
    #    in-kernel boundary masks at the true sequence end.
    B2, L2 = 8, 200
    x2 = jax.random.normal(k_x2, (B2, L2), dtype=jnp.float32)
    out2 = jax.block_until_ready(custom_conv1d(x2, weight, bias))
    ref2 = _reference(x2, weight, bias)
    assert out2.shape == (B2, L2)
    assert jnp.allclose(out2, ref2, atol=1e-5, rtol=1e-5)

    # 3) Multi-block grid over batch (parallel axis), divisible tiling.
    B3, L3 = 16, 256
    x3 = jax.random.normal(k_x3, (B3, L3), dtype=jnp.float32)
    out3 = jax.block_until_ready(custom_conv1d(x3, weight, bias, batch_tile=8))
    ref3 = _reference(x3, weight, bias)
    assert out3.shape == (B3, L3)
    assert jnp.allclose(out3, ref3, atol=1e-5, rtol=1e-5)

    print("KERNEL_OK")
</pallas_src>

<mosaic_0001>
module attributes {stable_mosaic.version = 11 : i64} {
  func.func @_conv1d_kernel(%arg0: i32, %arg1: memref<4xf32, #tpu.memory_space<smem>>, %arg2: memref<1xf32, #tpu.memory_space<smem>>, %arg3: memref<2x128xf32, #tpu.memory_space<vmem>>, %arg4: memref<2x128xf32, #tpu.memory_space<vmem>>) attributes {dimension_semantics = [#tpu.dimension_semantics<parallel>], iteration_bounds = array<i64: 1>, scalar_prefetch = 0 : i64, scratch_operands = 0 : i64, tpu.core_type = #tpu.core_type<tc>, window_params = [{transform_indices = @transform_0, window_bounds = array<i64: 4>}, {transform_indices = @transform_1, window_bounds = array<i64: 1>}, {transform_indices = @transform_2, window_bounds = array<i64: 2, 128>}, {transform_indices = @transform_3, window_bounds = array<i64: 2, 128>}]} {
    %c0 = arith.constant 0 : index
    %c0_0 = arith.constant 0 : index
    %0 = vector.load %arg3[%c0, %c0_0] : memref<2x128xf32, #tpu.memory_space<vmem>>, vector<2x128xf32>
    %1 = tpu.iota {dimensions = array<i32: 1>} : vector<2x128xi32>
    %c0_1 = arith.constant 0 : index
    %2 = memref.load %arg1[%c0_1] : memref<4xf32, #tpu.memory_space<smem>>
    %c1 = arith.constant 1 : index
    %3 = memref.load %arg1[%c1] : memref<4xf32, #tpu.memory_space<smem>>
    %c2 = arith.constant 2 : index
    %4 = memref.load %arg1[%c2] : memref<4xf32, #tpu.memory_space<smem>>
    %c3 = arith.constant 3 : index
    %5 = memref.load %arg1[%c3] : memref<4xf32, #tpu.memory_space<smem>>
    %c0_2 = arith.constant 0 : index
    %6 = memref.load %arg2[%c0_2] : memref<1xf32, #tpu.memory_space<smem>>
    %7 = vector.broadcast %4 : f32 to vector<2x128xf32>
    %8 = arith.mulf %7, %0 : vector<2x128xf32>
    %9 = vector.broadcast %6 : f32 to vector<2x128xf32>
    %10 = arith.addf %8, %9 : vector<2x128xf32>
    %c1_i32 = arith.constant 1 : i32
    %11 = tpu.dynamic_rotate %0 by %c1_i32 dim 1 : vector<2x128xf32>, i32 -> vector<2x128xf32>
    %c1_i32_3 = arith.constant 1 : i32
    %12 = vector.broadcast %c1_i32_3 : i32 to vector<2x128xi32>
    %13 = arith.cmpi sge, %1, %12 : vector<2x128xi32>
    %cst = arith.constant 0.000000e+00 : f32
    %14 = vector.broadcast %cst : f32 to vector<2x128xf32>
    %15 = arith.select %13, %11, %14 : vector<2x128xi1>, vector<2x128xf32>
    %16 = vector.broadcast %3 : f32 to vector<2x128xf32>
    %17 = arith.mulf %16, %15 : vector<2x128xf32>
    %18 = arith.addf %10, %17 : vector<2x128xf32>
    %c2_i32 = arith.constant 2 : i32
    %19 = tpu.dynamic_rotate %0 by %c2_i32 dim 1 : vector<2x128xf32>, i32 -> vector<2x128xf32>
    %c2_i32_4 = arith.constant 2 : i32
    %20 = vector.broadcast %c2_i32_4 : i32 to vector<2x128xi32>
    %21 = arith.cmpi sge, %1, %20 : vector<2x128xi32>
    %cst_5 = arith.constant 0.000000e+00 : f32
    %22 = vector.broadcast %cst_5 : f32 to vector<2x128xf32>
    %23 = arith.select %21, %19, %22 : vector<2x128xi1>, vector<2x128xf32>
    %24 = vector.broadcast %2 : f32 to vector<2x128xf32>
    %25 = arith.mulf %24, %23 : vector<2x128xf32>
    %26 = arith.addf %18, %25 : vector<2x128xf32>
    %c127_i32 = arith.constant 127 : i32
    %27 = tpu.dynamic_rotate %0 by %c127_i32 dim 1 : vector<2x128xf32>, i32 -> vector<2x128xf32>
    %c126_i32 = arith.constant 126 : i32
    %28 = vector.broadcast %c126_i32 : i32 to vector<2x128xi32>
    %29 = arith.cmpi sle, %1, %28 : vector<2x128xi32>
    %cst_6 = arith.constant 0.000000e+00 : f32
    %30 = vector.broadcast %cst_6 : f32 to vector<2x128xf32>
    %31 = arith.select %29, %27, %30 : vector<2x128xi1>, vector<2x128xf32>
    %32 = vector.broadcast %5 : f32 to vector<2x128xf32>
    %33 = arith.mulf %32, %31 : vector<2x128xf32>
    %34 = arith.addf %26, %33 : vector<2x128xf32>
    %c0_7 = arith.constant 0 : index
    %c0_8 = arith.constant 0 : index
    %35 = vector.load %arg4[%c0_7, %c0_8] : memref<2x128xf32, #tpu.memory_space<vmem>>, vector<2x128xf32>
    tpu.vector_store %arg4[%c0_7, %c0_8], %34 {strides = array<i32>} : memref<2x128xf32, #tpu.memory_space<vmem>>, vector<2x128xf32>,
    return
  }
  func.func @transform_0(%arg0: i32) -> i32 {
    %c0_i32 = arith.constant 0 : i32
    %c0_i32_0 = arith.constant 0 : i32
    return %c0_i32 : i32
  }
  func.func @transform_1(%arg0: i32) -> i32 {
    %c0_i32 = arith.constant 0 : i32
    %c0_i32_0 = arith.constant 0 : i32
    return %c0_i32 : i32
  }
  func.func @transform_2(%arg0: i32) -> (i32, i32) {
    %c0_i32 = arith.constant 0 : i32
    %c0_i32_0 = arith.constant 0 : i32
    return %arg0, %c0_i32 : i32, i32
  }
  func.func @transform_3(%arg0: i32) -> (i32, i32) {
    %c0_i32 = arith.constant 0 : i32
    %c0_i32_0 = arith.constant 0 : i32
    return %arg0, %c0_i32 : i32, i32
  }
}

</mosaic_0001>

<llo_original>
// kernel: tpu_custom_call.1
$region0: #{tpu_custom_call.1}
  #allocation0 [shape = 'u32[]', space=smem, size = 0x4, offset = 0x4, fixed_abs, tag = 'smem constant byte address 0x4 - core index']
  #allocation1 [shape = 'u32[144,128]{1,0:T(1,128)}', space=vmem, size = 0x12000, scoped, tag = 'internal scratch']
  #allocation2 [shape = 'f32[1]{0:T(128)S(6)}', space=smem, size = 0x200, scoped, tag = 'scoped memory for tpu_custom_call.1']
  %s0 = inlined_call_operand.vmem [shape: f32[4], index: 0, kind: input, shape index: {}]
  %s1 = inlined_call_operand.<no memory space> [shape: f32[1], index: 1, kind: input, shape index: {}]
  %s2 = inlined_call_operand.vmem [shape: f32[2,128], index: 2, kind: input, shape index: {}]
  %s3 = inlined_call_operand.hbm [shape: f32[2,128], index: 3, kind: output, shape index: {}]
  %s4 = sld [smem:[#allocation0]]
  $region26: #{tpu_custom_call.1} parent=0
    _
  %s6 = ssub.s32 1, %s4
  %s7 = scalar_select 0, %s6, %s4
  %8 = sst [smem:[#allocation2]] %s1
  $region1: #{tpu_custom_call.1} parent=0
    #allocation3 [shape = 'u8[512]{0}', space=smem, size = 0x200, scoped, tag = 'input window, operand 0, single buffered']
    #allocation4 [shape = 's32[1]{0}', space=sflag, size = 0x4, scoped, tag = 'scoped memory for tpu_custom_call.1']
    #allocation5 [shape = 's32[1]{0}', space=sflag, size = 0x4, scoped, tag = 'scoped memory for tpu_custom_call.1']
    #allocation6 [shape = 'u8[1024]{0}', space=vmem, size = 0x400, scoped, tag = 'output window, operand 0, single buffered']
    %9 = vsyncpa [#allocation5], 0
    %10 = vsyncpa [#allocation4], 0
    // Predicated region
    $region2: #{tpu_custom_call.1} parent=1 // pred_check
      _
    $region3: #{tpu_custom_call.1} parent=1 // pred_check_branch
      %12 = sbr.rel (0) target = $region5
    $region4: #{tpu_custom_call.1} parent=1 // pred_region
      %s14 = ssub.s32 16, 16
      %15 = vsyncadd [#allocation5], %s14
      %s17 = sshll.u32 %s0, 4
      %s18 = int_to_ptr.vmem [resolvable:$true] %s17
      %20 = dma.vmem_to_smem %s18, 16, [#allocation3], [#allocation5]
    $region5: #{tpu_custom_call.1} parent=1 // pred_fallthru
      _
    // Predicated region
    $region6: #{tpu_custom_call.1} parent=1 // pred_check
      _
    $region7: #{tpu_custom_call.1} parent=1 // pred_check_branch
      %22 = sbr.rel (0) target = $region9
    $region8: #{tpu_custom_call.1} parent=1 // pred_region
      _
    $region9: #{tpu_custom_call.1} parent=1 // pred_fallthru
      _
    // Predicated region
    $region10: #{tpu_custom_call.1} parent=1 // pred_check
      _
    $region11: #{tpu_custom_call.1} parent=1 // pred_check_branch
      %24 = sbr.rel (0) target = $region13
    $region12: #{tpu_custom_call.1} parent=1 // pred_region
      _
    $region13: #{tpu_custom_call.1} parent=1 // pred_fallthru
      _
    // Predicated region
    $region14: #{tpu_custom_call.1} parent=1 // pred_check
      _
    $region15: #{tpu_custom_call.1} parent=1 // pred_check_branch
      %26 = sbr.rel (0) target = $region17
    $region16: #{tpu_custom_call.1} parent=1 // pred_region
      %27 = dma.done [#allocation5], 16
    $region17: #{tpu_custom_call.1} parent=1 // pred_fallthru
      _
    %28 = sfence
    %v29 = vld [vmem:[%s2] sm:$0x3]
    %v30 = vlaneseq
    %v31 = vand.u32 %v30, 127
    %s32 = sld [smem:[#allocation3]]
    %s33 = sld [smem:[#allocation3 + $0x1]]
    %s34 = sld [smem:[#allocation3 + $0x2]]
    %s35 = sld [smem:[#allocation3 + $0x3]]
    %s36 = sld [smem:[#allocation2]]
    %v37 = vstv %s34
    %v38 = vmul.f32 %v37, %v29
    %v39 = vstv %s36
    %v40 = vadd.f32 %v38, %v39
    %41 = vrot.lane.b32.xlu0 %v29, 1
    %v42 = vpop.permute.xlu0 %41
    %vm43 = vcmp.ge.s32.totalorder %v31, 1
    %v44 = vsel %vm43, %v42, 0.0
    %v45 = vstv %s33
    %v46 = vmul.f32 %v45, %v44
    %v47 = vadd.f32 %v40, %v46
    %48 = vrot.lane.b32.xlu0 %v29, 2
    %v49 = vpop.permute.xlu0 %48
    %vm50 = vcmp.ge.s32.totalorder %v31, 2
    %v51 = vsel %vm50, %v49, 0.0
    %v52 = vstv %s32
    %v53 = vmul.f32 %v52, %v51
    %v54 = vadd.f32 %v47, %v53
    %55 = vrot.lane.b32.xlu0 %v29, 127
    %v56 = vpop.permute.xlu0 %55
    %vm57 = vcmp.le.s32.totalorder %v31, 126
    %v58 = vsel %vm57, %v56, 0.0
    %v59 = vstv %s35
    %v60 = vmul.f32 %v59, %v58
    %v61 = vadd.f32 %v54, %v60
    %62 = vst [vmem:[#allocation6] sm:$0x3] %v61
    // Predicated region
    $region18: #{tpu_custom_call.1} parent=1 // pred_check
      _
    $region19: #{tpu_custom_call.1} parent=1 // pred_check_branch
      %64 = sbr.rel (0) target = $region21
    $region20: #{tpu_custom_call.1} parent=1 // pred_region
      %s66 = ssub.s32 32, 32
      %67 = vsyncadd [#allocation4], %s66
      %s69 = sshll.u32 [#allocation6], 4
      %s70 = int_to_ptr.vmem [resolvable:$true] %s69
      %72 = dma.vmem_to_hbm [thread:$0]  %s70, 32, %s3, [#allocation4]
    $region21: #{tpu_custom_call.1} parent=1 // pred_fallthru
      _
    // Predicated region
    $region22: #{tpu_custom_call.1} parent=1 // pred_check
      _
    $region23: #{tpu_custom_call.1} parent=1 // pred_check_branch
      %74 = sbr.rel (0) target = $region25
    $region24: #{tpu_custom_call.1} parent=1 // pred_region
      %75 = dma.done [#allocation4], 32
    $region25: #{tpu_custom_call.1} parent=1 // pred_fallthru
      _
    %76 = vsyncpa [#allocation4], 1
    %77 = vsyncpa [#allocation5], 1

</llo_original>
